<compile_context>
chip_gen: v7x
topology: tpu7x:2x2x1
jax: 0.10.0
libtpu: 0.0.40
codegen_flags: <defaults>
</compile_context>

<pallas_src>
import jax
import jax.numpy as jnp
from jax.experimental import pallas as pl
from jax.experimental.pallas import tpu as pltpu

# ---- model hyper-params (opt.INP_DIM / opt.WIDTH / opt.OUT_DIM) ----
BATCH = 8
INP_DIM = 16
WIDTH = 32
OUT_DIM = 8


def _round_up(n, m):
    return ((n + m - 1) // m) * m


def mymodel_kernel(x_ref, w1_ref, wf_ref, b1_ref, b2_ref, o_ref):
    """o = relu(x @ w1 + b1) @ Wf + b2 for one batch tile (f32 epilogue)."""
    h = jnp.dot(x_ref[...], w1_ref[...], preferred_element_type=jnp.float32)
    h = jnp.maximum(h + b1_ref[...], 0.0)
    o_ref[...] = (
        jnp.dot(h.astype(wf_ref.dtype), wf_ref[...],
                preferred_element_type=jnp.float32)
        + b2_ref[...])


def prepare_fused_params(w1, b1, wr, wi, w2, b2, *, compute_dtype=jnp.float32):
    """Fold FFT -> complex mul -> iFFT.real -> final Linear into one matrix.

    Runs once at init (not in the per-forward hot path)."""
    n = wr.shape[0]
    k = jnp.arange(n, dtype=jnp.int32)
    # Exact range reduction: cos/sin of 2*pi*k*n/N are periodic in (k*n mod N),
    # keeping arguments in [0, 2*pi) for any WIDTH (no f32 range blow-up).
    kk = (k[:, None] * k[None, :]) % n
    ang = (2.0 * jnp.pi / float(n)) * kk.astype(jnp.float32)
    c = jnp.cos(ang)  # symmetric DFT cosine matrix
    s = jnp.sin(ang)  # symmetric DFT sine matrix
    # Row-vector convention (h is (B, WIDTH)):  o = h @ M^T
    mt = ((c * wr[None, :]) @ c + (s * wi[None, :]) @ c
          - (c * wi[None, :]) @ s + (s * wr[None, :]) @ s) * (1.0 / float(n))
    wf = (mt @ w2).astype(compute_dtype)                  # (WIDTH, OUT_DIM)
    return (w1.astype(compute_dtype),                     # (INP_DIM, WIDTH)
            wf,
            b1.reshape(1, -1).astype(jnp.float32),        # (1, WIDTH)
            b2.reshape(1, -1).astype(jnp.float32))        # (1, OUT_DIM)


def _pick_batch_tile(batch, cap=1024):
    """Large batch tiles (up to 1024 rows) to amortize the ~0.35us/step Pallas
    overhead, while keeping >=2 (even) grid steps when B allows so the
    "parallel" axis shards across both TensorCores on v7x."""
    steps = pl.cdiv(_round_up(batch, 8), cap)
    if steps < 2 and batch >= 16:
        steps = 2                       # v7x: give both TCs work
    if steps > 1 and steps % 2:
        steps += 1                      # prefer an even step count
    tb = _round_up(pl.cdiv(batch, steps), 8)
    return min(max(tb, 8), cap)


@jax.jit
def mymodel_forward(x, w1, wf, b1, b2):
    """x: (B, INP_DIM) -> (B, OUT_DIM) float32."""
    batch, inp_dim = x.shape
    width = w1.shape[1]
    out_dim = wf.shape[1]
    if x.dtype != w1.dtype:
        x = x.astype(w1.dtype)          # keep both matmul operands in MXU dtype

    tb = _pick_batch_tile(batch)
    # No wrapper pad / slice: ragged final block is handled by Pallas
    # (only valid rows are written back).
    grid = (pl.cdiv(batch, tb),)

    return pl.pallas_call(
        mymodel_kernel,
        out_shape=jax.ShapeDtypeStruct((batch, out_dim), jnp.float32),
        grid=grid,
        in_specs=[
            pl.BlockSpec((tb, inp_dim), lambda i: (i, 0)),        # x tile
            pl.BlockSpec((inp_dim, width), lambda i: (0, 0)),     # w1
            pl.BlockSpec((width, out_dim), lambda i: (0, 0)),     # folded Wf
            pl.BlockSpec((1, width), lambda i: (0, 0)),           # b1
            pl.BlockSpec((1, out_dim), lambda i: (0, 0)),         # b2
        ],
        out_specs=pl.BlockSpec((tb, out_dim), lambda i: (i, 0)),
        compiler_params=pltpu.CompilerParams(
            dimension_semantics=("parallel",)),                   # both TCs on v7x
    )(x, w1, wf, b1, b2)


def reference_forward(x, w1, b1, wr, wi, w2, b2):
    """Pure-JAX reference using jnp.fft (mirrors the PyTorch module semantics)."""
    h = jnp.maximum(x.astype(jnp.float32) @ w1 + b1, 0.0)
    hf = jnp.fft.fft(h, axis=-1)
    re, im = jnp.real(hf), jnp.imag(hf)
    re2 = re * wr - im * wi
    im2 = re * wi + im * wr
    z = jnp.real(jnp.fft.ifft(re2 + 1j * im2, axis=-1))
    return z.astype(jnp.float32) @ w2 + b2


if __name__ == "__main__":
    key = jax.random.PRNGKey(0)
    k_x, k_w1, k_b1, k_w2, k_b2, k_wr, k_wi, k_x2 = jax.random.split(key, 8)

    x = jax.random.normal(k_x, (BATCH, INP_DIM), dtype=jnp.float32)

    # nn.Linear(INP_DIM, WIDTH): weight stored transposed -> (INP_DIM, WIDTH)
    w1 = jax.random.normal(k_w1, (INP_DIM, WIDTH), dtype=jnp.float32) * 0.1
    b1 = jax.random.normal(k_b1, (WIDTH,), dtype=jnp.float32) * 0.1
    # ComplexMulLayer init: real_weights = ones, imag_weights = zeros
    wr = jnp.ones((WIDTH,), dtype=jnp.float32)
    wi = jnp.zeros((WIDTH,), dtype=jnp.float32)
    # nn.Linear(WIDTH, OUT_DIM): (WIDTH, OUT_DIM)
    w2 = jax.random.normal(k_w2, (WIDTH, OUT_DIM), dtype=jnp.float32) * 0.1
    b2 = jax.random.normal(k_b2, (OUT_DIM,), dtype=jnp.float32) * 0.1

    # --- check 1: module-default complex weights (ones / zeros), f32 ---
    p = prepare_fused_params(w1, b1, wr, wi, w2, b2, compute_dtype=jnp.float32)
    out = jax.block_until_ready(mymodel_forward(x, *p))
    ref = jax.block_until_ready(reference_forward(x, w1, b1, wr, wi, w2, b2))
    assert out.shape == (BATCH, OUT_DIM)
    assert jnp.allclose(out, ref, atol=1e-4, rtol=1e-4)

    # --- check 2: non-trivial complex weights (exercises the algebraic fold) ---
    wr2 = 1.0 + 0.1 * jax.random.normal(k_wr, (WIDTH,), dtype=jnp.float32)
    wi2 = 0.1 * jax.random.normal(k_wi, (WIDTH,), dtype=jnp.float32)
    q = prepare_fused_params(w1, b1, wr2, wi2, w2, b2, compute_dtype=jnp.float32)
    out2 = jax.block_until_ready(mymodel_forward(x, *q))
    ref2 = jax.block_until_ready(reference_forward(x, w1, b1, wr2, wi2, w2, b2))
    assert jnp.allclose(out2, ref2, atol=1e-4, rtol=1e-4)

    # --- check 3: larger ragged batch -> multi-step grid + partial final block
    #     (exercises the no-pad / no-slice path and the dual-TC grid split) ---
    xl = jax.random.normal(k_x2, (200, INP_DIM), dtype=jnp.float32)
    out3 = jax.block_until_ready(mymodel_forward(xl, *q))
    ref3 = jax.block_until_ready(reference_forward(xl, w1, b1, wr2, wi2, w2, b2))
    assert out3.shape == (200, OUT_DIM)
    assert jnp.allclose(out3, ref3, atol=1e-4, rtol=1e-4)

    # --- check 4: bf16 weights/activations on the MXU (f32 accumulation) ---
    r = prepare_fused_params(w1, b1, wr2, wi2, w2, b2, compute_dtype=jnp.bfloat16)
    out4 = jax.block_until_ready(mymodel_forward(x.astype(jnp.bfloat16), *r))
    assert jnp.allclose(out4, ref2, atol=3e-2, rtol=3e-2)

    print("KERNEL_OK")
</pallas_src>

<mosaic_0001>
module attributes {stable_mosaic.version = 11 : i64} {
  func.func @mymodel_kernel(%arg0: i32, %arg1: memref<8x16xf32, #tpu.memory_space<vmem>>, %arg2: memref<16x32xf32, #tpu.memory_space<vmem>>, %arg3: memref<32x8xf32, #tpu.memory_space<vmem>>, %arg4: memref<1x32xf32, #tpu.memory_space<vmem>>, %arg5: memref<1x8xf32, #tpu.memory_space<vmem>>, %arg6: memref<8x8xf32, #tpu.memory_space<vmem>>) attributes {dimension_semantics = [#tpu.dimension_semantics<parallel>], iteration_bounds = array<i64: 1>, scalar_prefetch = 0 : i64, scratch_operands = 0 : i64, tpu.core_type = #tpu.core_type<tc>, window_params = [{transform_indices = @transform_0, window_bounds = array<i64: 8, 16>}, {pipeline_mode = #tpu.pipeline_mode<synchronous>, transform_indices = @transform_1, window_bounds = array<i64: 16, 32>}, {pipeline_mode = #tpu.pipeline_mode<synchronous>, transform_indices = @transform_2, window_bounds = array<i64: 32, 8>}, {pipeline_mode = #tpu.pipeline_mode<synchronous>, transform_indices = @transform_3, window_bounds = array<i64: 1, 32>}, {pipeline_mode = #tpu.pipeline_mode<synchronous>, transform_indices = @transform_4, window_bounds = array<i64: 1, 8>}, {transform_indices = @transform_5, window_bounds = array<i64: 8, 8>}]} {
    %c0 = arith.constant 0 : index
    %c0_0 = arith.constant 0 : index
    %0 = vector.load %arg1[%c0, %c0_0] : memref<8x16xf32, #tpu.memory_space<vmem>>, vector<8x16xf32>
    %c0_1 = arith.constant 0 : index
    %c0_2 = arith.constant 0 : index
    %1 = vector.load %arg2[%c0_1, %c0_2] : memref<16x32xf32, #tpu.memory_space<vmem>>, vector<16x32xf32>
    %cst = arith.constant dense<0.000000e+00> : vector<8x32xf32>
    %2 = tpu.matmul %0, %1, %cst {dimension_numbers = #tpu.dot_dimension_numbers<[1], [0], [0], [1], [0, 0, 1, 1], [], []>} : vector<8x16xf32>, vector<16x32xf32>, vector<8x32xf32> -> vector<8x32xf32>
    %c0_3 = arith.constant 0 : index
    %c0_4 = arith.constant 0 : index
    %3 = vector.load %arg4[%c0_3, %c0_4] : memref<1x32xf32, #tpu.memory_space<vmem>>, vector<1x32xf32>
    %4 = vector.broadcast %3 : vector<1x32xf32> to vector<8x32xf32>
    %5 = arith.addf %2, %4 : vector<8x32xf32>
    %cst_5 = arith.constant 0.000000e+00 : f32
    %6 = vector.broadcast %cst_5 : f32 to vector<8x32xf32>
    %7 = arith.maximumf %5, %6 : vector<8x32xf32>
    %c0_6 = arith.constant 0 : index
    %c0_7 = arith.constant 0 : index
    %8 = vector.load %arg3[%c0_6, %c0_7] : memref<32x8xf32, #tpu.memory_space<vmem>>, vector<32x8xf32>
    %cst_8 = arith.constant dense<0.000000e+00> : vector<8x8xf32>
    %9 = tpu.matmul %7, %8, %cst_8 {dimension_numbers = #tpu.dot_dimension_numbers<[1], [0], [0], [1], [0, 0, 1, 1], [], []>} : vector<8x32xf32>, vector<32x8xf32>, vector<8x8xf32> -> vector<8x8xf32>
    %c0_9 = arith.constant 0 : index
    %c0_10 = arith.constant 0 : index
    %10 = vector.load %arg5[%c0_9, %c0_10] : memref<1x8xf32, #tpu.memory_space<vmem>>, vector<1x8xf32>
    %11 = vector.broadcast %10 : vector<1x8xf32> to vector<8x8xf32>
    %12 = arith.addf %9, %11 : vector<8x8xf32>
    %c0_11 = arith.constant 0 : index
    %c0_12 = arith.constant 0 : index
    %13 = vector.load %arg6[%c0_11, %c0_12] : memref<8x8xf32, #tpu.memory_space<vmem>>, vector<8x8xf32>
    tpu.vector_store %arg6[%c0_11, %c0_12], %12 {strides = array<i32>} : memref<8x8xf32, #tpu.memory_space<vmem>>, vector<8x8xf32>,
    return
  }
  func.func @transform_0(%arg0: i32) -> (i32, i32) {
    %c0_i32 = arith.constant 0 : i32
    %c0_i32_0 = arith.constant 0 : i32
    return %arg0, %c0_i32 : i32, i32
  }
  func.func @transform_1(%arg0: i32) -> (i32, i32) {
    %c0_i32 = arith.constant 0 : i32
    %c0_i32_0 = arith.constant 0 : i32
    %c0_i32_1 = arith.constant 0 : i32
    return %c0_i32, %c0_i32_0 : i32, i32
  }
  func.func @transform_2(%arg0: i32) -> (i32, i32) {
    %c0_i32 = arith.constant 0 : i32
    %c0_i32_0 = arith.constant 0 : i32
    %c0_i32_1 = arith.constant 0 : i32
    return %c0_i32, %c0_i32_0 : i32, i32
  }
  func.func @transform_3(%arg0: i32) -> (i32, i32) {
    %c0_i32 = arith.constant 0 : i32
    %c0_i32_0 = arith.constant 0 : i32
    %c0_i32_1 = arith.constant 0 : i32
    return %c0_i32, %c0_i32_0 : i32, i32
  }
  func.func @transform_4(%arg0: i32) -> (i32, i32) {
    %c0_i32 = arith.constant 0 : i32
    %c0_i32_0 = arith.constant 0 : i32
    %c0_i32_1 = arith.constant 0 : i32
    return %c0_i32, %c0_i32_0 : i32, i32
  }
  func.func @transform_5(%arg0: i32) -> (i32, i32) {
    %c0_i32 = arith.constant 0 : i32
    %c0_i32_0 = arith.constant 0 : i32
    return %arg0, %c0_i32 : i32, i32
  }
}

</mosaic_0001>

<llo_original>
// kernel: mymodel_forward.1
$region0: #{mymodel_forward.1}
  #allocation0 [shape = 'u32[]', space=smem, size = 0x4, offset = 0x4, fixed_abs, tag = 'smem constant byte address 0x4 - core index']
  #allocation1 [shape = 'u32[144,128]{1,0:T(1,128)}', space=vmem, size = 0x12000, scoped, tag = 'internal scratch']
  %s0 = inlined_call_operand.vmem [shape: f32[8,16], index: 0, kind: input, shape index: {}]
  %s1 = inlined_call_operand.vmem [shape: f32[16,32], index: 1, kind: input, shape index: {}]
  %s2 = inlined_call_operand.vmem [shape: f32[32,8], index: 2, kind: input, shape index: {}]
  %s3 = inlined_call_operand.vmem [shape: f32[1,32], index: 3, kind: input, shape index: {}]
  %s4 = inlined_call_operand.vmem [shape: f32[1,8], index: 4, kind: input, shape index: {}]
  %s5 = inlined_call_operand.hbm [shape: f32[8,8], index: 5, kind: output, shape index: {}]
  %s6 = sld [smem:[#allocation0]]
  $region30: #{mymodel_forward.1} parent=0
    _
  %s8 = ssub.s32 1, %s6
  %s9 = scalar_select 0, %s8, %s6
  $region1: #{mymodel_forward.1} parent=0
    #allocation2 [shape = 'u8[4096]{0}', space=vmem, size = 0x1000, scoped, tag = 'output window, operand 0, single buffered']
    #allocation3 [shape = 's32[1]{0}', space=sflag, size = 0x4, scoped, tag = 'scoped memory for mymodel_forward.1']
    %10 = vsyncpa [#allocation3], 0
    // Predicated region
    $region2: #{mymodel_forward.1} parent=1 // pred_check
      _
    $region3: #{mymodel_forward.1} parent=1 // pred_check_branch
      %12 = sbr.rel (0) target = $region5
    $region4: #{mymodel_forward.1} parent=1 // pred_region
      _
    $region5: #{mymodel_forward.1} parent=1 // pred_fallthru
      _
    // Predicated region
    $region6: #{mymodel_forward.1} parent=1 // pred_check
      _
    $region7: #{mymodel_forward.1} parent=1 // pred_check_branch
      %14 = sbr.rel (0) target = $region9
    $region8: #{mymodel_forward.1} parent=1 // pred_region
      _
    $region9: #{mymodel_forward.1} parent=1 // pred_fallthru
      _
    // Predicated region
    $region10: #{mymodel_forward.1} parent=1 // pred_check
      _
    $region11: #{mymodel_forward.1} parent=1 // pred_check_branch
      %16 = sbr.rel (0) target = $region13
    $region12: #{mymodel_forward.1} parent=1 // pred_region
      _
    $region13: #{mymodel_forward.1} parent=1 // pred_fallthru
      _
    // Predicated region
    $region14: #{mymodel_forward.1} parent=1 // pred_check
      _
    $region15: #{mymodel_forward.1} parent=1 // pred_check_branch
      %18 = sbr.rel (0) target = $region17
    $region16: #{mymodel_forward.1} parent=1 // pred_region
      _
    $region17: #{mymodel_forward.1} parent=1 // pred_fallthru
      _
    // Predicated region
    $region18: #{mymodel_forward.1} parent=1 // pred_check
      _
    $region19: #{mymodel_forward.1} parent=1 // pred_check_branch
      %20 = sbr.rel (0) target = $region21
    $region20: #{mymodel_forward.1} parent=1 // pred_region
      _
    $region21: #{mymodel_forward.1} parent=1 // pred_fallthru
      _
    %v21 = vld [vmem:[%s0] sm:$0xff]
    %v22 = vld [vmem:[%s1] sm:$0xff]
    %v23 = vld [vmem:[%s1 + $0x8] sm:$0xff]
    %v24 = vld [vmem:[%s3] sm:$0x1]
    %v26 = vlaneseq
    %v27 = vshrl.u32 %v26, 7
    %v28 = vsub.s32 0, %v27
    %v29 = vrot.slane %v24, %v28
    %vm31 = vcmask 130048
    %v33 = vsel %vm31, %v21, 0
    %35 = vmatprep.subr.mxu0 0.0
    %36 = vmatpush1.msra.mxu0 %v22
    %37 = vmatprep.subr.mxu0 0.0
    %38 = vmatpush1.msra.mxu0 %v23
    %39 = vmatprep.subr.mxu0 0.0
    %40 = vmatpush1.msra.mxu0 0.0
    %41 = vmatprep.subr.mxu0 0.0
    %42 = vmatpush1.msra.mxu0 0.0
    %43 = vmatprep.subr.mxu0 0.0
    %44 = vmatpush1.msra.mxu0 0.0
    %45 = vmatprep.subr.mxu0 0.0
    %46 = vmatpush1.msra.mxu0 0.0
    %47 = vmatprep.subr.mxu0 0.0
    %48 = vmatpush1.msra.mxu0 0.0
    %49 = vmatprep.subr.mxu0 0.0
    %50 = vmatpush1.msra.mxu0 0.0
    %51 = vmatprep.subr.mxu0 0.0
    %52 = vmatpush1.msra.mxu0 0.0
    %53 = vmatprep.subr.mxu0 0.0
    %54 = vmatpush1.msra.mxu0 0.0
    %55 = vmatprep.subr.mxu0 0.0
    %56 = vmatpush1.msra.mxu0 0.0
    %57 = vmatprep.subr.mxu0 0.0
    %58 = vmatpush1.msra.mxu0 0.0
    %59 = vmatprep.subr.mxu0 0.0
    %60 = vmatpush1.msra.mxu0 0.0
    %61 = vmatprep.subr.mxu0 0.0
    %62 = vmatpush1.msra.mxu0 0.0
    %63 = vmatprep.subr.mxu0 0.0
    %64 = vmatpush1.msra.mxu0 0.0
    %65 = vmatprep.subr.mxu0 0.0
    %66 = vmatpush1.msra.mxu0 0.0
    %67 = vmatprep.subr.mxu0 0.0
    %68 = vmatpush1.msra.mxu0 0.0
    %69 = vmatprep.subr.mxu0 0.0
    %70 = vmatpush1.msra.mxu0 0.0
    %71 = vmatprep.subr.mxu0 0.0
    %72 = vmatpush1.msra.mxu0 0.0
    %73 = vmatprep.subr.mxu0 0.0
    %74 = vmatpush1.msra.mxu0 0.0
    %75 = vmatprep.subr.mxu0 0.0
    %76 = vmatpush1.msra.mxu0 0.0
    %77 = vmatprep.subr.mxu0 0.0
    %78 = vmatpush1.msra.mxu0 0.0
    %79 = vmatprep.subr.mxu0 0.0
    %80 = vmatpush1.msra.mxu0 0.0
    %81 = vmatprep.subr.mxu0 0.0
    %82 = vmatpush1.msra.mxu0 0.0
    %83 = vmatprep.subr.mxu0 0.0
    %84 = vmatpush1.msra.mxu0 0.0
    %85 = vmatprep.subr.mxu0 0.0
    %86 = vmatpush1.msra.mxu0 0.0
    %87 = vmatprep.subr.mxu0 0.0
    %88 = vmatpush1.msra.mxu0 0.0
    %89 = vmatprep.subr.mxu0 0.0
    %90 = vmatpush1.msra.mxu0 0.0
    %91 = vmatprep.subr.mxu0 0.0
    %92 = vmatpush1.msra.mxu0 0.0
    %93 = vmatprep.subr.mxu0 0.0
    %94 = vmatpush1.msra.mxu0 0.0
    %95 = vmatprep.subr.mxu0 0.0
    %96 = vmatpush1.msra.mxu0 0.0
    %97 = vmatprep.subr.mxu0 0.0
    %98 = vmatpush1.msra.mxu0 0.0
    %99 = vmatprep.mubr.f32.mxu0 0.0
    %100 = vmatmul.mubr.f32.gmra.mrb[0].mxu0 %v33
    %v101 = vpop.f32.mrb[0].mxu0
    %v102 = vadd.f32 %v29, %v101
    %v103 = vpop.f32.mrb[0].mxu0
    %104 = vdwg.mxu0
    %v105 = vmax.f32 %v102, 0.0
    %v106 = vld [vmem:[%s2] sm:$0xff]
    %v107 = vld [vmem:[%s2 + $0x8] sm:$0xff]
    %v108 = vld [vmem:[%s2 + $0x10] sm:$0xff]
    %v109 = vld [vmem:[%s2 + $0x18] sm:$0xff]
    %v110 = vld [vmem:[%s4] sm:$0x1]
    %v112 = vlaneseq
    %v113 = vshrl.u32 %v112, 7
    %v114 = vsub.s32 0, %v113
    %v115 = vrot.slane %v110, %v114
    %vm117 = vcmask 261120
    %v119 = vsel %vm117, %v105, 0
    %121 = vmatprep.subr.mxu0 0.0
    %122 = vmatpush1.msra.mxu0 %v106
    %123 = vmatprep.subr.mxu0 0.0
    %124 = vmatpush1.msra.mxu0 %v107
    %125 = vmatprep.subr.mxu0 0.0
    %126 = vmatpush1.msra.mxu0 %v108
    %127 = vmatprep.subr.mxu0 0.0
    %128 = vmatpush1.msra.mxu0 %v109
    %129 = vmatprep.subr.mxu0 0.0
    %130 = vmatpush1.msra.mxu0 0.0
    %131 = vmatprep.subr.mxu0 0.0
    %132 = vmatpush1.msra.mxu0 0.0
    %133 = vmatprep.subr.mxu0 0.0
    %134 = vmatpush1.msra.mxu0 0.0
    %135 = vmatprep.subr.mxu0 0.0
    %136 = vmatpush1.msra.mxu0 0.0
    %137 = vmatprep.subr.mxu0 0.0
    %138 = vmatpush1.msra.mxu0 0.0
    %139 = vmatprep.subr.mxu0 0.0
    %140 = vmatpush1.msra.mxu0 0.0
    %141 = vmatprep.subr.mxu0 0.0
    %142 = vmatpush1.msra.mxu0 0.0
    %143 = vmatprep.subr.mxu0 0.0
    %144 = vmatpush1.msra.mxu0 0.0
    %145 = vmatprep.subr.mxu0 0.0
    %146 = vmatpush1.msra.mxu0 0.0
    %147 = vmatprep.subr.mxu0 0.0
    %148 = vmatpush1.msra.mxu0 0.0
    %149 = vmatprep.subr.mxu0 0.0
    %150 = vmatpush1.msra.mxu0 0.0
    %151 = vmatprep.subr.mxu0 0.0
    %152 = vmatpush1.msra.mxu0 0.0
    %153 = vmatprep.subr.mxu0 0.0
    %154 = vmatpush1.msra.mxu0 0.0
    %155 = vmatprep.subr.mxu0 0.0
    %156 = vmatpush1.msra.mxu0 0.0
    %157 = vmatprep.subr.mxu0 0.0
    %158 = vmatpush1.msra.mxu0 0.0
    %159 = vmatprep.subr.mxu0 0.0
    %160 = vmatpush1.msra.mxu0 0.0
    %161 = vmatprep.subr.mxu0 0.0
    %162 = vmatpush1.msra.mxu0 0.0
    %163 = vmatprep.subr.mxu0 0.0
    %164 = vmatpush1.msra.mxu0 0.0
    %165 = vmatprep.subr.mxu0 0.0
    %166 = vmatpush1.msra.mxu0 0.0
    %167 = vmatprep.subr.mxu0 0.0
    %168 = vmatpush1.msra.mxu0 0.0
    %169 = vmatprep.subr.mxu0 0.0
    %170 = vmatpush1.msra.mxu0 0.0
    %171 = vmatprep.subr.mxu0 0.0
    %172 = vmatpush1.msra.mxu0 0.0
    %173 = vmatprep.subr.mxu0 0.0
    %174 = vmatpush1.msra.mxu0 0.0
    %175 = vmatprep.subr.mxu0 0.0
    %176 = vmatpush1.msra.mxu0 0.0
    %177 = vmatprep.subr.mxu0 0.0
    %178 = vmatpush1.msra.mxu0 0.0
    %179 = vmatprep.subr.mxu0 0.0
    %180 = vmatpush1.msra.mxu0 0.0
    %181 = vmatprep.subr.mxu0 0.0
    %182 = vmatpush1.msra.mxu0 0.0
    %183 = vmatprep.subr.mxu0 0.0
    %184 = vmatpush1.msra.mxu0 0.0
    %185 = vmatprep.mubr.f32.mxu0 0.0
    %186 = vmatmul.mubr.f32.gmra.mrb[0].mxu0 %v119
    %v187 = vpop.f32.mrb[0].mxu0
    %v188 = vadd.f32 %v115, %v187
    %v189 = vpop.f32.mrb[0].mxu0
    %190 = vdwg.mxu0
    %vm191 = vcmask 64512
    %192 = vst.msk [vmem:[#allocation2] sm:$0xff] %vm191, %v188
    // Predicated region
    $region22: #{mymodel_forward.1} parent=1 // pred_check
      _
    $region23: #{mymodel_forward.1} parent=1 // pred_check_branch
      %194 = sbr.rel (0) target = $region25
    $region24: #{mymodel_forward.1} parent=1 // pred_region
      %s196 = ssub.s32 128, 128
      %197 = vsyncadd [#allocation3], %s196
      %s199 = sshll.u32 [#allocation2], 4
      %s200 = int_to_ptr.vmem [resolvable:$true] %s199
      %202 = dma.vmem_to_hbm [thread:$0]  %s200, 128, %s5, [#allocation3]
    $region25: #{mymodel_forward.1} parent=1 // pred_fallthru
      _
    // Predicated region
    $region26: #{mymodel_forward.1} parent=1 // pred_check
      _
    $region27: #{mymodel_forward.1} parent=1 // pred_check_branch
      %204 = sbr.rel (0) target = $region29
    $region28: #{mymodel_forward.1} parent=1 // pred_region
      %205 = dma.done [#allocation3], 128
    $region29: #{mymodel_forward.1} parent=1 // pred_fallthru
      _
    %206 = vsyncpa [#allocation3], 1

</llo_original>
